<compile_context>
chip_gen: v6e
topology: v6e:2x2x1
jax: 0.10.0
libtpu: 0.0.40
codegen_flags: <defaults>
</compile_context>

<pallas_src>
import functools

import jax
import jax.numpy as jnp
import numpy as np
from jax import lax
from jax.experimental import pallas as pl
from jax.experimental.pallas import tpu as pltpu

LANE = 128
_VMEM_MARGIN = 6 << 20           # headroom for count buffers + compiler scratch


# ----------------------------------------------------------------------------
# Tiling helpers
# ----------------------------------------------------------------------------
def _cdiv(a, b):
    return -(-a // b)


def _round_up(v, m):
    return _cdiv(v, m) * m


def _detect_vmem_bytes():
    """Best-effort per-TensorCore VMEM capacity; conservative default (v7x)."""
    try:
        info = pltpu.get_tpu_info()
        for attr in ("vmem_capacity_bytes", "vmem_size_bytes", "vmem_bytes"):
            v = getattr(info, attr, None)
            if v:
                return int(v)
    except Exception:
        pass
    return 64 * 1024 * 1024


def _chip_config():
    vmem = _detect_vmem_bytes()
    if vmem >= 100 * 1024 * 1024:
        # v5e / v6e: 128 MiB VMEM, single TensorCore -> big blocks, few steps.
        return {"target_block": 6 << 20, "min_blocks": 2, "vmem_cap": 96 << 20}
    # v7x (64 MiB per TC, 2 TCs) or unknown: smaller blocks, keep >= 8 grid
    # steps so the 'parallel' axis can be sharded across both TensorCores.
    return {"target_block": 3 << 20, "min_blocks": 8, "vmem_cap": 40 << 20}


def _choose_tile(rows, bytes_per_row, sub, cfg):
    """Row tile (multiple of `sub`): as large as the block budget allows,
    >= min_blocks grid steps when there is enough work, never below the ~256
    row per-t DMA-chunk floor, and the (in+out, double-buffered) footprint
    stays under the VMEM cap."""
    target, min_blocks, vmem_cap = (cfg["target_block"], cfg["min_blocks"],
                                    cfg["vmem_cap"])
    rows_r = _round_up(rows, sub)

    tile = max(sub, (target // max(bytes_per_row, 1)) // sub * sub)
    floor_rows = min(rows_r, _round_up(256, sub))          # DMA-chunk floor
    per_block = _round_up(_cdiv(rows, min_blocks), sub)    # feed min_blocks steps
    tile = min(tile, max(floor_rows, per_block))
    tile = max(tile, floor_rows)
    tile = min(tile, rows_r)
    max_by_vmem = ((vmem_cap - _VMEM_MARGIN) // 4 // max(bytes_per_row, 1)) \
        // sub * sub
    tile = min(tile, max(sub, max_by_vmem))
    return int(max(sub, tile))


# ----------------------------------------------------------------------------
# Kernels
# ----------------------------------------------------------------------------
def _if_spike_kernel(thresh_ref, x_ref, o_ref, cnt_ref, *, rows, sub):
    """T > 0 path: integrate-and-fire over the time axis.

    x_ref / o_ref: (T, tile_r, 128) blocks in the input dtype,
    cnt_ref:       (1, 8, 128) f32 per-block partial spike sums,
    thresh_ref:    (1, 1) f32 in SMEM.
    Membrane potential is accumulated in f32 and stays vreg-resident per
    `sub`-row chunk.
    """
    thre = thresh_ref[0, 0]
    T = x_ref.shape[0]
    tile_r = x_ref.shape[1]
    half = 0.5 * thre                         # hoisted out of all loops
    num_chunks = tile_r // sub
    block_row0 = pl.program_id(0) * tile_r
    need_mask = (rows % tile_r) != 0          # boundary block has garbage rows

    def chunk_body(c, acc):
        r0 = pl.multiple_of(c * sub, sub)

        def t_body(t, carry):
            mem, ssum = carry
            mem = mem + x_ref[t, pl.ds(r0, sub), :].astype(jnp.float32)
            # ZIF forward: spike = (mem - thresh >= 0) * thresh
            spike = jnp.where(mem >= thre, thre, 0.0)
            o_ref[t, pl.ds(r0, sub), :] = spike.astype(o_ref.dtype)
            return mem - spike, ssum + spike

        init = (jnp.full((sub, LANE), half, jnp.float32),
                jnp.zeros((sub, LANE), jnp.float32))
        # Cap the unroll: small T fully unrolls; large T avoids huge basic
        # blocks / spills (kernel is DMA-bound anyway).
        _, ssum = lax.fori_loop(0, T, t_body, init, unroll=min(T, 8))

        if need_mask:
            # Mask spike-count contributions from rows past the valid range
            # (the OOB output stores are already masked by Pallas).
            rid = lax.broadcasted_iota(jnp.int32, (sub, LANE), 0) \
                + (block_row0 + r0)
            ssum = jnp.where(rid < rows, ssum, 0.0)
        return acc + ssum

    acc = lax.fori_loop(0, num_chunks, chunk_body,
                        jnp.zeros((sub, LANE), jnp.float32))
    # (sub,128) -> (sub//8, 8, 128) is a pure vreg regroup; axis-0 sum = VALU.
    cnt_ref[0] = acc.reshape(sub // 8, 8, LANE).sum(axis=0)


def _if_quant_kernel(thresh_ref, x_ref, o_ref, *, L):
    """T == 0 path: clamp + floor quantization (ANN calibration mode)."""
    thre = thresh_ref[0, 0]
    inv_thre = 1.0 / thre                     # one scalar divide per block
    scale = thre * (1.0 / L)                  # folds the *1/L and *thre muls
    x = x_ref[...].astype(jnp.float32)
    y = jnp.clip(x * inv_thre, 0.0, 1.0)
    o_ref[...] = (jnp.floor(y * L + 0.5) * scale).astype(o_ref.dtype)


# ----------------------------------------------------------------------------
# Wrapper
# ----------------------------------------------------------------------------
def if_forward(x, thresh, *, T=0, L=8):
    """Pallas equivalent of IF.forward.

    Returns (y, spike_count, time_count); the counts mirror one forward's
    contribution to the module's running buffers (0 when T == 0).
    """
    thresh_arr = jnp.asarray(thresh, jnp.float32).reshape((1, 1))
    orig_shape = x.shape
    dtype = x.dtype
    itemsize = jnp.dtype(dtype).itemsize
    row_align = max(8, 32 // itemsize)        # f32 -> 8, bf16 -> 16, int8 -> 32
    sub = 2 * row_align                       # vreg-resident chunk rows
    cfg = _chip_config()

    if T > 0:
        # ExpandTemporalDim: (T*B, C, H, W) -> (T, B*C*H*W); lane-align only.
        total = int(np.prod(orig_shape))
        n = total // T
        rows = _cdiv(n, LANE)
        pad = rows * LANE - n                 # <= 127 elems, usually 0

        flat = x.reshape(T, n)
        if pad:
            # TODO(synk): a non-128-aligned feature map costs one XLA pad copy;
            # typical layer sizes take the zero-copy path.
            flat = jnp.pad(flat, ((0, 0), (0, pad)))
        x3 = flat.reshape(T, rows, LANE)

        tile_r = _choose_tile(rows, T * LANE * itemsize, sub, cfg)
        num_blocks = _cdiv(rows, tile_r)      # last block may be partial
        block_bytes = T * tile_r * LANE * itemsize
        vmem_limit = min(cfg["vmem_cap"], 4 * block_bytes + (8 << 20))

        out, cnt_partial = pl.pallas_call(
            functools.partial(_if_spike_kernel, rows=rows, sub=sub),
            out_shape=(
                jax.ShapeDtypeStruct((T, rows, LANE), dtype),
                jax.ShapeDtypeStruct((num_blocks, 8, LANE), jnp.float32),
            ),
            grid_spec=pltpu.PrefetchScalarGridSpec(
                num_scalar_prefetch=0,
                grid=(num_blocks,),
                in_specs=[
                    pl.BlockSpec((1, 1), lambda i: (0, 0),
                                 memory_space=pltpu.MemorySpace.SMEM),
                    pl.BlockSpec((T, tile_r, LANE), lambda i: (0, i, 0)),
                ],
                out_specs=[
                    pl.BlockSpec((T, tile_r, LANE), lambda i: (0, i, 0)),
                    pl.BlockSpec((1, 8, LANE), lambda i: (i, 0, 0)),
                ],
            ),
            compiler_params=pltpu.CompilerParams(
                # 1-D 'parallel' grid: sharded across both TensorCores on v7x.
                dimension_semantics=("parallel",),
                vmem_limit_bytes=vmem_limit),
        )(thresh_arr, x3)

        # Fused per-block partials -> tiny reduction.  Zero-padded lanes never
        # spike for thresh > 0; garbage boundary rows are masked in-kernel.
        spike_count = cnt_partial.sum()           # self.spike_count += spike.sum()
        time_count = jnp.float32(total)           # self.time_count  += spike.numel()

        # MergeTemporalDim: (T, B, C, H, W) -> (T*B, C, H, W)
        y = out.reshape(T, rows * LANE)
        if pad:
            y = y[:, :n]
        y = y.reshape(orig_shape)
        return y, spike_count, time_count

    else:
        # TODO(synk): `self.last_mem = x.detach().clone()` is a stateful buffer
        # capture with no functional effect on the output; not reproduced.
        n = int(np.prod(orig_shape))
        rows = _cdiv(n, LANE)
        pad = rows * LANE - n

        flat = x.reshape(-1)
        if pad:
            flat = jnp.pad(flat, (0, pad))
        x2 = flat.reshape(rows, LANE)

        tile_r = _choose_tile(rows, LANE * itemsize, sub, cfg)
        num_blocks = _cdiv(rows, tile_r)
        block_bytes = tile_r * LANE * itemsize
        vmem_limit = min(cfg["vmem_cap"], 4 * block_bytes + (8 << 20))

        out = pl.pallas_call(
            functools.partial(_if_quant_kernel, L=float(L)),
            out_shape=jax.ShapeDtypeStruct((rows, LANE), dtype),
            grid_spec=pltpu.PrefetchScalarGridSpec(
                num_scalar_prefetch=0,
                grid=(num_blocks,),
                in_specs=[
                    pl.BlockSpec((1, 1), lambda i: (0, 0),
                                 memory_space=pltpu.MemorySpace.SMEM),
                    pl.BlockSpec((tile_r, LANE), lambda i: (i, 0)),
                ],
                out_specs=pl.BlockSpec((tile_r, LANE), lambda i: (i, 0)),
            ),
            compiler_params=pltpu.CompilerParams(
                dimension_semantics=("parallel",),
                vmem_limit_bytes=vmem_limit),
        )(thresh_arr, x2)

        y = out.reshape(-1)
        if pad:
            y = y[:n]
        y = y.reshape(orig_shape)
        return y, jnp.float32(0.0), jnp.float32(0.0)


# ----------------------------------------------------------------------------
# Pure-JAX references (mirror PyTorch semantics exactly)
# ----------------------------------------------------------------------------
def _ref_spike(x, thresh, T):
    xe = x.reshape((T, x.shape[0] // T) + x.shape[1:]).astype(jnp.float32)
    mem = 0.5 * thresh
    outs = []
    for t in range(T):
        mem = mem + xe[t]
        spike = (mem - thresh >= 0).astype(jnp.float32) * thresh
        mem = mem - spike
        outs.append(spike)
    return jnp.stack(outs, 0).reshape(x.shape)


def _ref_quant(x, thresh, L):
    y = jnp.clip(x.astype(jnp.float32) / thresh, 0.0, 1.0)
    y = jnp.floor(y * L + 0.5) / L
    return y * thresh


if __name__ == "__main__":
    key = jax.random.PRNGKey(0)
    k1, k2, k3 = jax.random.split(key, 3)

    # IF.__init__ defaults: thresh=8.0, L=8, gama=1.0
    thresh = 8.0
    L = 8

    # ---- T > 0 spiking path: x is (T*B, C, H, W) ----
    T, B, C, H, W = 4, 2, 4, 8, 8
    x_spk = jax.random.normal(k1, (T * B, C, H, W), jnp.float32) * 4.0
    y_spk, spike_count, time_count = if_forward(x_spk, thresh, T=T, L=L)
    y_spk = jax.block_until_ready(y_spk)
    ref_spk = _ref_spike(x_spk, thresh, T)
    assert np.allclose(np.asarray(y_spk), np.asarray(ref_spk), atol=1e-5), \
        "spiking path mismatch"
    assert np.allclose(float(spike_count), float(ref_spk.sum()), rtol=1e-5)
    assert int(time_count) == ref_spk.size

    # ---- T > 0 with lane-ragged shape (exercises pad + boundary masking) ----
    T2 = 2
    x_rag = jax.random.normal(k3, (T2 * 2, 3, 10, 13), jnp.float32) * 4.0
    y_rag, cnt_rag, tc_rag = if_forward(x_rag, thresh, T=T2, L=L)
    y_rag = jax.block_until_ready(y_rag)
    ref_rag = _ref_spike(x_rag, thresh, T2)
    assert np.allclose(np.asarray(y_rag), np.asarray(ref_rag), atol=1e-5), \
        "ragged spiking path mismatch"
    assert np.allclose(float(cnt_rag), float(ref_rag.sum()), rtol=1e-5)
    assert int(tc_rag) == ref_rag.size

    # ---- T == 0 quantization path: x is (B, C, H, W) ----
    x_q = jax.random.normal(k2, (2, 4, 16, 16), jnp.float32) * 6.0
    y_q, _, _ = if_forward(x_q, thresh, T=0, L=L)
    y_q = jax.block_until_ready(y_q)
    ref_q = _ref_quant(x_q, thresh, L)
    assert np.allclose(np.asarray(y_q), np.asarray(ref_q), atol=1e-5), \
        "quantization path mismatch"

    print("KERNEL_OK")
</pallas_src>

<mosaic_0001>
module attributes {stable_mosaic.version = 11 : i64} {
  func.func @_if_spike_kernel(%arg0: i32, %arg1: memref<1x1xf32, #tpu.memory_space<smem>>, %arg2: memref<4x16x128xf32, #tpu.memory_space<vmem>>, %arg3: memref<4x16x128xf32, #tpu.memory_space<vmem>>, %arg4: memref<1x8x128xf32, #tpu.memory_space<vmem>>) attributes {dimension_semantics = [#tpu.dimension_semantics<parallel>], iteration_bounds = array<i64: 1>, scalar_prefetch = 0 : i64, scratch_operands = 0 : i64, tpu.core_type = #tpu.core_type<tc>, window_params = [{transform_indices = @transform_0, window_bounds = array<i64: 1, 1>}, {transform_indices = @transform_1, window_bounds = array<i64: 4, 16, 128>}, {transform_indices = @transform_2, window_bounds = array<i64: 4, 16, 128>}, {transform_indices = @transform_3, window_bounds = array<i64: 1, 8, 128>}]} {
    %c0 = arith.constant 0 : index
    %c0_0 = arith.constant 0 : index
    %0 = memref.load %arg1[%c0, %c0_0] : memref<1x1xf32, #tpu.memory_space<smem>>
    %cst = arith.constant 5.000000e-01 : f32
    %1 = arith.mulf %cst, %0 : f32
    %c16_i32 = arith.constant 16 : i32
    %2 = arith.muli %arg0, %c16_i32 : i32
    %cst_1 = arith.constant 0.000000e+00 : f32
    %3 = vector.broadcast %cst_1 : f32 to vector<16x128xf32>
    %c0_i32 = arith.constant 0 : i32
    %c16_i32_2 = arith.constant 16 : i32
    %4 = arith.muli %c0_i32, %c16_i32_2 : i32
    %5 = tpu.assume_multiple %4, 16 : i32
    %6 = vector.broadcast %1 : f32 to vector<16x128xf32>
    %cst_3 = arith.constant 0.000000e+00 : f32
    %7 = vector.broadcast %cst_3 : f32 to vector<16x128xf32>
    %c0_i32_4 = arith.constant 0 : i32
    %8 = arith.index_cast %c0_i32_4 : i32 to index
    %9 = arith.index_cast %5 : i32 to index
    %c0_5 = arith.constant 0 : index
    %10 = vector.load %arg2[%8, %9, %c0_5] : memref<4x16x128xf32, #tpu.memory_space<vmem>>, vector<1x16x128xf32>
    %11 = vector.shape_cast %10 : vector<1x16x128xf32> to vector<16x128xf32>
    %12 = arith.addf %6, %11 : vector<16x128xf32>
    %13 = vector.broadcast %0 : f32 to vector<16x128xf32>
    %14 = arith.cmpf oge, %12, %13 : vector<16x128xf32>
    %cst_6 = arith.constant 0.000000e+00 : f32
    %15 = vector.broadcast %0 : f32 to vector<16x128xf32>
    %16 = vector.broadcast %cst_6 : f32 to vector<16x128xf32>
    %17 = arith.select %14, %15, %16 : vector<16x128xi1>, vector<16x128xf32>
    %18 = arith.index_cast %c0_i32_4 : i32 to index
    %19 = arith.index_cast %5 : i32 to index
    %c0_7 = arith.constant 0 : index
    %20 = vector.load %arg3[%18, %19, %c0_7] : memref<4x16x128xf32, #tpu.memory_space<vmem>>, vector<1x16x128xf32>
    %21 = vector.shape_cast %20 : vector<1x16x128xf32> to vector<16x128xf32>
    %22 = vector.shape_cast %17 : vector<16x128xf32> to vector<1x16x128xf32>
    tpu.vector_store %arg3[%18, %19, %c0_7], %22 {strides = array<i32>} : memref<4x16x128xf32, #tpu.memory_space<vmem>>, vector<1x16x128xf32>,
    %23 = arith.subf %12, %17 : vector<16x128xf32>
    %24 = arith.addf %7, %17 : vector<16x128xf32>
    %c1_i32 = arith.constant 1 : i32
    %25 = arith.index_cast %c1_i32 : i32 to index
    %26 = arith.index_cast %5 : i32 to index
    %c0_8 = arith.constant 0 : index
    %27 = vector.load %arg2[%25, %26, %c0_8] : memref<4x16x128xf32, #tpu.memory_space<vmem>>, vector<1x16x128xf32>
    %28 = vector.shape_cast %27 : vector<1x16x128xf32> to vector<16x128xf32>
    %29 = arith.addf %23, %28 : vector<16x128xf32>
    %30 = vector.broadcast %0 : f32 to vector<16x128xf32>
    %31 = arith.cmpf oge, %29, %30 : vector<16x128xf32>
    %cst_9 = arith.constant 0.000000e+00 : f32
    %32 = vector.broadcast %0 : f32 to vector<16x128xf32>
    %33 = vector.broadcast %cst_9 : f32 to vector<16x128xf32>
    %34 = arith.select %31, %32, %33 : vector<16x128xi1>, vector<16x128xf32>
    %35 = arith.index_cast %c1_i32 : i32 to index
    %36 = arith.index_cast %5 : i32 to index
    %c0_10 = arith.constant 0 : index
    %37 = vector.load %arg3[%35, %36, %c0_10] : memref<4x16x128xf32, #tpu.memory_space<vmem>>, vector<1x16x128xf32>
    %38 = vector.shape_cast %37 : vector<1x16x128xf32> to vector<16x128xf32>
    %39 = vector.shape_cast %34 : vector<16x128xf32> to vector<1x16x128xf32>
    tpu.vector_store %arg3[%35, %36, %c0_10], %39 {strides = array<i32>} : memref<4x16x128xf32, #tpu.memory_space<vmem>>, vector<1x16x128xf32>,
    %40 = arith.subf %29, %34 : vector<16x128xf32>
    %41 = arith.addf %24, %34 : vector<16x128xf32>
    %c2_i32 = arith.constant 2 : i32
    %42 = arith.index_cast %c2_i32 : i32 to index
    %43 = arith.index_cast %5 : i32 to index
    %c0_11 = arith.constant 0 : index
    %44 = vector.load %arg2[%42, %43, %c0_11] : memref<4x16x128xf32, #tpu.memory_space<vmem>>, vector<1x16x128xf32>
    %45 = vector.shape_cast %44 : vector<1x16x128xf32> to vector<16x128xf32>
    %46 = arith.addf %40, %45 : vector<16x128xf32>
    %47 = vector.broadcast %0 : f32 to vector<16x128xf32>
    %48 = arith.cmpf oge, %46, %47 : vector<16x128xf32>
    %cst_12 = arith.constant 0.000000e+00 : f32
    %49 = vector.broadcast %0 : f32 to vector<16x128xf32>
    %50 = vector.broadcast %cst_12 : f32 to vector<16x128xf32>
    %51 = arith.select %48, %49, %50 : vector<16x128xi1>, vector<16x128xf32>
    %52 = arith.index_cast %c2_i32 : i32 to index
    %53 = arith.index_cast %5 : i32 to index
    %c0_13 = arith.constant 0 : index
    %54 = vector.load %arg3[%52, %53, %c0_13] : memref<4x16x128xf32, #tpu.memory_space<vmem>>, vector<1x16x128xf32>
    %55 = vector.shape_cast %54 : vector<1x16x128xf32> to vector<16x128xf32>
    %56 = vector.shape_cast %51 : vector<16x128xf32> to vector<1x16x128xf32>
    tpu.vector_store %arg3[%52, %53, %c0_13], %56 {strides = array<i32>} : memref<4x16x128xf32, #tpu.memory_space<vmem>>, vector<1x16x128xf32>,
    %57 = arith.subf %46, %51 : vector<16x128xf32>
    %58 = arith.addf %41, %51 : vector<16x128xf32>
    %c3_i32 = arith.constant 3 : i32
    %59 = arith.index_cast %c3_i32 : i32 to index
    %60 = arith.index_cast %5 : i32 to index
    %c0_14 = arith.constant 0 : index
    %61 = vector.load %arg2[%59, %60, %c0_14] : memref<4x16x128xf32, #tpu.memory_space<vmem>>, vector<1x16x128xf32>
    %62 = vector.shape_cast %61 : vector<1x16x128xf32> to vector<16x128xf32>
    %63 = arith.addf %57, %62 : vector<16x128xf32>
    %64 = vector.broadcast %0 : f32 to vector<16x128xf32>
    %65 = arith.cmpf oge, %63, %64 : vector<16x128xf32>
    %cst_15 = arith.constant 0.000000e+00 : f32
    %66 = vector.broadcast %0 : f32 to vector<16x128xf32>
    %67 = vector.broadcast %cst_15 : f32 to vector<16x128xf32>
    %68 = arith.select %65, %66, %67 : vector<16x128xi1>, vector<16x128xf32>
    %69 = arith.index_cast %c3_i32 : i32 to index
    %70 = arith.index_cast %5 : i32 to index
    %c0_16 = arith.constant 0 : index
    %71 = vector.load %arg3[%69, %70, %c0_16] : memref<4x16x128xf32, #tpu.memory_space<vmem>>, vector<1x16x128xf32>
    %72 = vector.shape_cast %71 : vector<1x16x128xf32> to vector<16x128xf32>
    %73 = vector.shape_cast %68 : vector<16x128xf32> to vector<1x16x128xf32>
    tpu.vector_store %arg3[%69, %70, %c0_16], %73 {strides = array<i32>} : memref<4x16x128xf32, #tpu.memory_space<vmem>>, vector<1x16x128xf32>,
    %74 = arith.subf %63, %68 : vector<16x128xf32>
    %75 = arith.addf %58, %68 : vector<16x128xf32>
    %c4_i32 = arith.constant 4 : i32
    %76 = tpu.iota {dimensions = array<i32: 0>} : vector<16x128xi32>
    %77 = arith.addi %2, %5 : i32
    %78 = vector.broadcast %77 : i32 to vector<16x128xi32>
    %79 = arith.addi %76, %78 : vector<16x128xi32>
    %c4_i32_17 = arith.constant 4 : i32
    %80 = vector.broadcast %c4_i32_17 : i32 to vector<16x128xi32>
    %81 = arith.cmpi slt, %79, %80 : vector<16x128xi32>
    %cst_18 = arith.constant 0.000000e+00 : f32
    %82 = vector.broadcast %cst_18 : f32 to vector<16x128xf32>
    %83 = arith.select %81, %75, %82 : vector<16x128xi1>, vector<16x128xf32>
    %84 = arith.addf %3, %83 : vector<16x128xf32>
    %c1_i32_19 = arith.constant 1 : i32
    %85 = vector.shape_cast %84 : vector<16x128xf32> to vector<2x8x128xf32>
    %cst_20 = arith.constant dense<0.000000e+00> : vector<8x128xf32>
    %86 = vector.multi_reduction <add>, %85, %cst_20 [0] : vector<2x8x128xf32> to vector<8x128xf32>
    %c0_21 = arith.constant 0 : index
    %c0_22 = arith.constant 0 : index
    %c0_23 = arith.constant 0 : index
    %87 = vector.load %arg4[%c0_21, %c0_22, %c0_23] : memref<1x8x128xf32, #tpu.memory_space<vmem>>, vector<1x8x128xf32>
    %88 = vector.shape_cast %87 : vector<1x8x128xf32> to vector<8x128xf32>
    %89 = vector.shape_cast %86 : vector<8x128xf32> to vector<1x8x128xf32>
    tpu.vector_store %arg4[%c0_21, %c0_22, %c0_23], %89 {strides = array<i32>} : memref<1x8x128xf32, #tpu.memory_space<vmem>>, vector<1x8x128xf32>,
    return
  }
  func.func @transform_0(%arg0: i32) -> (i32, i32) {
    %c0_i32 = arith.constant 0 : i32
    %c0_i32_0 = arith.constant 0 : i32
    %c0_i32_1 = arith.constant 0 : i32
    return %c0_i32, %c0_i32_0 : i32, i32
  }
  func.func @transform_1(%arg0: i32) -> (i32, i32, i32) {
    %c0_i32 = arith.constant 0 : i32
    %c0_i32_0 = arith.constant 0 : i32
    %c0_i32_1 = arith.constant 0 : i32
    return %c0_i32, %arg0, %c0_i32_0 : i32, i32, i32
  }
  func.func @transform_2(%arg0: i32) -> (i32, i32, i32) {
    %c0_i32 = arith.constant 0 : i32
    %c0_i32_0 = arith.constant 0 : i32
    %c0_i32_1 = arith.constant 0 : i32
    return %c0_i32, %arg0, %c0_i32_0 : i32, i32, i32
  }
  func.func @transform_3(%arg0: i32) -> (i32, i32, i32) {
    %c0_i32 = arith.constant 0 : i32
    %c0_i32_0 = arith.constant 0 : i32
    %c0_i32_1 = arith.constant 0 : i32
    return %arg0, %c0_i32, %c0_i32_0 : i32, i32, i32
  }
}

</mosaic_0001>

<llo_original>
// kernel: tpu_custom_call.1
$region0: #{tpu_custom_call.1}
  #allocation0 [shape = 'u32[]', space=smem, size = 0x4, offset = 0x4, fixed_abs, tag = 'smem constant byte address 0x4 - core index']
  #allocation1 [shape = 'u32[144,128]{1,0:T(1,128)}', space=vmem, size = 0x12000, scoped, tag = 'internal scratch']
  #allocation2 [shape = 'f32[1,1]{1,0:T(1,128)S(6)}', space=smem, size = 0x200, scoped, tag = 'scoped memory for tpu_custom_call.1']
  #allocation9 [shape = 's32[]', space=sflag, size = 0x4, offset = 0, fixed_abs, tag = 'sflag constant byte address 0x0 - dummy sync flag']
  #allocation11 [shape = 's32[]', space=sflag, size = 0x4, offset = 0, fixed_abs, tag = 'sflag constant byte address 0x0 - dummy sync flag']
  %s0 = inlined_call_operand.<no memory space> [shape: f32[1,1], index: 0, kind: input, shape index: {}]
  %s1 = inlined_call_operand.hbm [shape: f32[4,4,128], index: 1, kind: input, shape index: {}]
  %s2 = inlined_call_operand.hbm [shape: f32[4,4,128], index: 2, kind: output, shape index: {0}]
  %s3 = inlined_call_operand.hbm [shape: f32[1,8,128], index: 3, kind: output, shape index: {1}]
  %4 = xla_tuple %s2, %s3
  %s5 = sld [smem:[#allocation0]]
  $region30: #{tpu_custom_call.1} parent=0
    _
  %s7 = ssub.s32 1, %s5
  %s8 = scalar_select 0, %s7, %s5
  %9 = sst [smem:[#allocation2]] %s0
  $region1: #{tpu_custom_call.1} parent=0
    #allocation3 [shape = 'u8[32768]{0}', space=vmem, size = 0x8000, scoped, tag = 'input window, operand 1, single buffered']
    #allocation4 [shape = 's32[1]{0}', space=sflag, size = 0x4, scoped, tag = 'scoped memory for tpu_custom_call.1']
    #allocation5 [shape = 's32[1]{0}', space=sflag, size = 0x4, scoped, tag = 'scoped memory for tpu_custom_call.1']
    #allocation6 [shape = 'u8[32768]{0}', space=vmem, size = 0x8000, scoped, tag = 'output window, operand 0, single buffered']
    #allocation7 [shape = 'u8[4096]{0}', space=vmem, size = 0x1000, scoped, tag = 'output window, operand 1, single buffered']
    #allocation8 [shape = 's32[1]{0}', space=sflag, size = 0x4, scoped, tag = 'scoped memory for tpu_custom_call.1']
    %10 = vsyncpa [#allocation4], 0
    %11 = vsyncpa [#allocation5], 0
    %12 = vsyncpa [#allocation8], 0
    // Predicated region
    $region2: #{tpu_custom_call.1} parent=1 // pred_check
      _
    $region3: #{tpu_custom_call.1} parent=1 // pred_check_branch
      %14 = sbr.rel (0) target = $region5
    $region4: #{tpu_custom_call.1} parent=1 // pred_region
      _
    $region5: #{tpu_custom_call.1} parent=1 // pred_fallthru
      _
    // Predicated region
    $region6: #{tpu_custom_call.1} parent=1 // pred_check
      _
    $region7: #{tpu_custom_call.1} parent=1 // pred_check_branch
      %16 = sbr.rel (0) target = $region9
    $region8: #{tpu_custom_call.1} parent=1 // pred_region
      #allocation10 [shape = 'u32[6]{0}', space=smem, size = 0x18, scoped, tag = 'DMA stride descriptor']
      %s18 = ssub.s32 1024, 256
      %19 = vsyncadd [#allocation4], %s18
      %s21 = sshll.u32 1, 14
      %s22 = sxor.u32 4294967295, %s21
      %s24 = sld [smem:[#allocation0]]
      %s25 = sadd.s32 2, %s24
      %s27 = sshll.u32 7, 26
      %s28 = sxor.u32 4294967295, %s27
      %s29 = sand.u32 0, %s28
      %s30 = sshll.u32 %s25, 26
      %s31 = sor.u32 %s29, %s30
      %s32 = sshll.u32 [#allocation3], 4
      %s33 = int_to_ptr.vmem [resolvable:$true] %s32
      %39 = sst [smem:[#allocation10]] 64
      %s40 = scalar_lea.smem [#allocation10], 1
      %41 = sst [smem:[%s40]] 256
      %s42 = scalar_lea.smem [#allocation10], 2
      %43 = sst [smem:[%s42]] 1
      %s44 = scalar_lea.smem [#allocation10], 3
      %45 = sst [smem:[%s44]] 64
      %s46 = scalar_lea.smem [#allocation10], 4
      %47 = sst [smem:[%s46]] 64
      %s48 = scalar_lea.smem [#allocation10], 5
      %49 = sst [smem:[%s48]] 4
      %51 = dma.general %s1, 256, %s33, [#allocation4], 131072, [#allocation10], %s31, 0
    $region9: #{tpu_custom_call.1} parent=1 // pred_fallthru
      _
    // Predicated region
    $region10: #{tpu_custom_call.1} parent=1 // pred_check
      _
    $region11: #{tpu_custom_call.1} parent=1 // pred_check_branch
      %53 = sbr.rel (0) target = $region13
    $region12: #{tpu_custom_call.1} parent=1 // pred_region
      %54 = dma.done [#allocation4], 1024
    $region13: #{tpu_custom_call.1} parent=1 // pred_fallthru
      _
    %s55 = sld [smem:[#allocation2]]
    %s56 = smul.f32 %s55, 0.5
    %s57 = smul.u32 0, 16
    %v58 = vstv %s56
    %v59 = vld [vmem:[#allocation3] sm:$0xff]
    %v60 = vld [vmem:[#allocation3 + $0x8] sm:$0xff]
    %v61 = vadd.f32 %v58, %v59
    %v62 = vadd.f32 %v58, %v60
    %v63 = vstv %s55
    %vm64 = vcmp.ge.f32.partialorder %v61, %v63
    %vm65 = vcmp.ge.f32.partialorder %v62, %v63
    %v66 = vsel %vm64, %v63, 0.0
    %v67 = vsel %vm65, %v63, 0.0
    %68 = vst [vmem:[#allocation6] sm:$0xff] %v66
    %69 = vst [vmem:[#allocation6 + $0x8] sm:$0xff] %v67
    %v70 = vsub.f32 %v61, %v66
    %v71 = vsub.f32 %v62, %v67
    %v72 = vadd.f32 %v66, 0.0
    %v73 = vadd.f32 %v67, 0.0
    %s74 = sadd.s32 0, 16
    %s75 = scalar_lea.vmem [#allocation3], %s74
    %v76 = vld [vmem:[%s75] sm:$0xff]
    %v77 = vld [vmem:[%s75 + $0x8] sm:$0xff]
    %v78 = vadd.f32 %v70, %v76
    %v79 = vadd.f32 %v71, %v77
    %vm80 = vcmp.ge.f32.partialorder %v78, %v63
    %vm81 = vcmp.ge.f32.partialorder %v79, %v63
    %v82 = vsel %vm80, %v63, 0.0
    %v83 = vsel %vm81, %v63, 0.0
    %s84 = scalar_lea.vmem [#allocation6], %s74
    %85 = vst [vmem:[%s84] sm:$0xff] %v82
    %86 = vst [vmem:[%s84 + $0x8] sm:$0xff] %v83
    %v87 = vsub.f32 %v78, %v82
    %v88 = vsub.f32 %v79, %v83
    %v89 = vadd.f32 %v72, %v82
    %v90 = vadd.f32 %v73, %v83
    %s91 = sadd.s32 0, 32
    %s92 = scalar_lea.vmem [#allocation3], %s91
    %v93 = vld [vmem:[%s92] sm:$0xff]
    %v94 = vld [vmem:[%s92 + $0x8] sm:$0xff]
    %v95 = vadd.f32 %v87, %v93
    %v96 = vadd.f32 %v88, %v94
    %vm97 = vcmp.ge.f32.partialorder %v95, %v63
    %vm98 = vcmp.ge.f32.partialorder %v96, %v63
    %v99 = vsel %vm97, %v63, 0.0
    %v100 = vsel %vm98, %v63, 0.0
    %s101 = scalar_lea.vmem [#allocation6], %s91
    %102 = vst [vmem:[%s101] sm:$0xff] %v99
    %103 = vst [vmem:[%s101 + $0x8] sm:$0xff] %v100
    %v104 = vsub.f32 %v95, %v99
    %v105 = vsub.f32 %v96, %v100
    %v106 = vadd.f32 %v89, %v99
    %v107 = vadd.f32 %v90, %v100
    %s108 = sadd.s32 0, 48
    %s109 = scalar_lea.vmem [#allocation3], %s108
    %v110 = vld [vmem:[%s109] sm:$0xff]
    %v111 = vld [vmem:[%s109 + $0x8] sm:$0xff]
    %v112 = vadd.f32 %v104, %v110
    %v113 = vadd.f32 %v105, %v111
    %vm114 = vcmp.ge.f32.partialorder %v112, %v63
    %vm115 = vcmp.ge.f32.partialorder %v113, %v63
    %v116 = vsel %vm114, %v63, 0.0
    %v117 = vsel %vm115, %v63, 0.0
    %s118 = scalar_lea.vmem [#allocation6], %s108
    %119 = vst [vmem:[%s118] sm:$0xff] %v116
    %120 = vst [vmem:[%s118 + $0x8] sm:$0xff] %v117
    %v121 = vadd.f32 %v106, %v116
    %v122 = vadd.f32 %v107, %v117
    %v123 = vlaneseq
    %v124 = vshrl.u32 %v123, 7
    %v125 = vadd.s32 %v124, 8
    %s126 = sadd.s32 %s57, 0
    %v127 = vstv %s126
    %v128 = vadd.s32 %v124, %v127
    %v129 = vadd.s32 %v125, %v127
    %vm130 = vcmp.lt.s32.totalorder %v128, 4
    %vm131 = vcmp.lt.s32.totalorder %v129, 4
    %v132 = vsel %vm130, %v121, 0.0
    %v133 = vsel %vm131, %v122, 0.0
    %v134 = vadd.f32 %v132, 0.0
    %v135 = vadd.f32 %v133, 0.0
    %v136 = vadd.f32 %v134, %v135
    %137 = vst [vmem:[#allocation7] sm:$0xff] %v136
    // Predicated region
    $region14: #{tpu_custom_call.1} parent=1 // pred_check
      _
    $region15: #{tpu_custom_call.1} parent=1 // pred_check_branch
      %139 = sbr.rel (0) target = $region17
    $region16: #{tpu_custom_call.1} parent=1 // pred_region
      #allocation12 [shape = 'u32[6]{0}', space=smem, size = 0x18, scoped, tag = 'DMA stride descriptor']
      %s141 = ssub.s32 1024, 256
      %142 = vsyncadd [#allocation5], %s141
      %s144 = sshll.u32 1, 14
      %s145 = sxor.u32 4294967295, %s144
      %s148 = sshll.u32 7, 18
      %s149 = sxor.u32 4294967295, %s148
      %s150 = sand.u32 0, %s149
      %s152 = sor.u32 %s150, 0
      %s153 = sshll.u32 [#allocation6], 4
      %s154 = int_to_ptr.vmem [resolvable:$true] %s153
      %160 = sst [smem:[#allocation12]] 256
      %s161 = scalar_lea.smem [#allocation12], 1
      %162 = sst [smem:[%s161]] 64
      %s163 = scalar_lea.smem [#allocation12], 2
      %164 = sst [smem:[%s163]] 1
      %s165 = scalar_lea.smem [#allocation12], 3
      %166 = sst [smem:[%s165]] 64
      %s167 = scalar_lea.smem [#allocation12], 4
      %168 = sst [smem:[%s167]] 64
      %s169 = scalar_lea.smem [#allocation12], 5
      %170 = sst [smem:[%s169]] 4
      %172 = dma.general %s154, 256, %s2, [#allocation5], 131072, [#allocation12], %s152, 0
    $region17: #{tpu_custom_call.1} parent=1 // pred_fallthru
      _
    // Predicated region
    $region18: #{tpu_custom_call.1} parent=1 // pred_check
      _
    $region19: #{tpu_custom_call.1} parent=1 // pred_check_branch
      %174 = sbr.rel (0) target = $region21
    $region20: #{tpu_custom_call.1} parent=1 // pred_region
      %s176 = ssub.s32 128, 128
      %177 = vsyncadd [#allocation8], %s176
      %s179 = sshll.u32 [#allocation7], 4
      %s180 = int_to_ptr.vmem [resolvable:$true] %s179
      %182 = dma.vmem_to_hbm [thread:$0]  %s180, 128, %s3, [#allocation8]
    $region21: #{tpu_custom_call.1} parent=1 // pred_fallthru
      _
    // Predicated region
    $region22: #{tpu_custom_call.1} parent=1 // pred_check
      _
    $region23: #{tpu_custom_call.1} parent=1 // pred_check_branch
      %184 = sbr.rel (0) target = $region25
    $region24: #{tpu_custom_call.1} parent=1 // pred_region
      %185 = dma.done [#allocation5], 1024
    $region25: #{tpu_custom_call.1} parent=1 // pred_fallthru
      _
    // Predicated region
    $region26: #{tpu_custom_call.1} parent=1 // pred_check
      _
    $region27: #{tpu_custom_call.1} parent=1 // pred_check_branch
      %187 = sbr.rel (0) target = $region29
    $region28: #{tpu_custom_call.1} parent=1 // pred_region
      %188 = dma.done [#allocation8], 128
    $region29: #{tpu_custom_call.1} parent=1 // pred_fallthru
      _
    %189 = vsyncpa [#allocation4], 1
    %190 = vsyncpa [#allocation5], 1
    %191 = vsyncpa [#allocation8], 1

</llo_original>
